<compile_context>
chip_gen: v6e
topology: v6e:2x2x1
jax: 0.10.0
libtpu: 0.0.40
codegen_flags: <defaults>
</compile_context>

<pallas_src>
import jax
import jax.numpy as jnp
from jax.experimental import pallas as pl
from jax.experimental.pallas import tpu as pltpu

EM_SIZE = 32
H1, H2, OUT = 200, 80, 2          # torch Linear sizes
H1P, H2P, OUTP = 256, 128, 128    # lane-padded (multiples of 128) for hidden layers


def _round_up(x, m):
    return (x + m - 1) // m * m


def _pick_vmem_limit():
    """Generation-aware scoped-VMEM limit (conservative fallback if query fails)."""
    try:
        cap = pltpu.get_tpu_info().vmem_capacity_bytes
        # leave ~16 MiB headroom, never ask for more than 96 MiB
        return int(min(max(cap - 16 * 1024 * 1024, 32 * 1024 * 1024),
                       96 * 1024 * 1024))
    except Exception:
        return 32 * 1024 * 1024


def rec_mlp_kernel(x_ref, w1_ref, b1_ref, w2_ref, b2_ref, w3_ref, b3_ref, out_ref):
    # x_ref: (TB, 2*EM) bf16 = concat([target_emb, sum_L(history_emb)], axis=1)
    #
    # fc1 -> relu   (EmbeddingBag 'sum' + torch.cat already folded into x)
    h1 = jnp.dot(x_ref[...], w1_ref[...], preferred_element_type=jnp.float32)
    h1 = jnp.maximum(h1 + b1_ref[...], 0.0)                       # (TB, 256)

    # TODO(synk): Dropout(0.5) is stochastic in torch training mode; implemented
    # as eval-mode identity here.

    # fc2 -> relu (padded K/N rows/cols are zero, numerically inert)
    h2 = jnp.dot(h1.astype(w2_ref.dtype), w2_ref[...],
                 preferred_element_type=jnp.float32) + b2_ref[...]
    h2 = jnp.maximum(h2, 0.0)                                     # (TB, 128)

    # fc3 — compute on the lane-padded weight, store only the 2 real logits
    out = jnp.dot(h2.astype(w3_ref.dtype), w3_ref[...],
                  preferred_element_type=jnp.float32) + b3_ref[...]  # (TB, 128)
    out_ref[...] = out[:, :OUT].astype(out_ref.dtype)             # (TB, 2)


def rec_model_forward(params, movie_history, target_movie, *,
                      block_b=4096, compute_dtype=jnp.bfloat16):
    """movie_history: (B, L) int32, -1 = padding; target_movie: (B,) int32."""
    # Row 0 of the table is zeroed once at init (torch re-zeroes it every
    # forward; the table is never mutated here, so the result is identical).
    table = params["table"]
    B, L = movie_history.shape
    EM = table.shape[1]
    K = 2 * EM

    # --- embedding gathers + history reduction: stay in XLA (glue) ---
    tgt_emb = jnp.take(table, target_movie.reshape(-1) + 1, axis=0)     # (B, EM) f32
    hist_sum = jnp.take(table, movie_history + 1, axis=0).sum(axis=1)   # (B, EM) f32 sum
    x = jnp.concatenate([tgt_emb, hist_sum], axis=1).astype(compute_dtype)  # (B, 2*EM)

    # --- weight prep: transpose + pad hidden dims to lane widths ---
    w1 = jnp.pad(params["fc1_w"].T, ((0, 0), (0, H1P - H1)))            # (64, 256)
    b1 = jnp.pad(params["fc1_b"], (0, H1P - H1)).reshape(1, H1P)
    w2 = jnp.pad(params["fc2_w"].T, ((0, H1P - H1), (0, H2P - H2)))     # (256, 128)
    b2 = jnp.pad(params["fc2_b"], (0, H2P - H2)).reshape(1, H2P)
    w3 = jnp.pad(params["fc3_w"].T, ((0, H2P - H2), (0, OUTP - OUT)))   # (128, 128)
    b3 = jnp.pad(params["fc3_b"], (0, OUTP - OUT)).reshape(1, OUTP)

    w1, w2, w3 = (w.astype(compute_dtype) for w in (w1, w2, w3))
    b1, b2, b3 = (b.astype(jnp.float32) for b in (b1, b2, b3))

    # --- batch tiling: balanced tiles, multiple of 16 (bf16 sublane packing) ---
    n_tiles = max(1, pl.cdiv(B, block_b))
    if B >= 4096:
        n_tiles = max(n_tiles, 2)   # guarantee >=2 grid steps -> megacore on v7x
    tb = _round_up(pl.cdiv(B, n_tiles), 16)
    b_pad = _round_up(B, tb)
    if b_pad != B:
        x = jnp.pad(x, ((0, b_pad - B), (0, 0)))
    grid = (b_pad // tb,)

    batch = lambda i: (i, 0)   # batch-tiled operands
    full = lambda i: (0, 0)    # weights/biases: whole-array, resident across grid

    flops = 2 * b_pad * (K * H1P + H1P * H2P + H2P * OUTP)
    bytes_accessed = (
        b_pad * K * x.dtype.itemsize
        + sum(int(a.size) * a.dtype.itemsize for a in (w1, b1, w2, b2, w3, b3))
        + b_pad * OUT * 4)
    cost = pl.CostEstimate(flops=flops, transcendentals=0,
                           bytes_accessed=bytes_accessed)

    out_padded = pl.pallas_call(
        rec_mlp_kernel,
        out_shape=jax.ShapeDtypeStruct((b_pad, OUT), jnp.float32),
        grid=grid,
        in_specs=[
            pl.BlockSpec((tb, K), batch),           # concat([tgt, hist_sum]) activations
            pl.BlockSpec((K, H1P), full),           # w1
            pl.BlockSpec((1, H1P), full),           # b1
            pl.BlockSpec((H1P, H2P), full),         # w2
            pl.BlockSpec((1, H2P), full),           # b2
            pl.BlockSpec((H2P, OUTP), full),        # w3 (lane-padded)
            pl.BlockSpec((1, OUTP), full),          # b3
        ],
        out_specs=pl.BlockSpec((tb, OUT), batch),   # narrow (tb, 2) f32 writeback
        compiler_params=pltpu.CompilerParams(
            dimension_semantics=("parallel",),      # megacore sharding on v7x
            vmem_limit_bytes=_pick_vmem_limit(),
        ),
        cost_estimate=cost,
    )(x, w1, b1, w2, b2, w3, b3)

    return out_padded[:B]


def rec_model_reference(params, movie_history, target_movie):
    """Pure-JAX f32 reference mirroring the torch forward (eval-mode dropout)."""
    table = params["table"]   # row 0 already zero
    tgt = jnp.take(table, target_movie.reshape(-1) + 1, axis=0)
    hist = jnp.take(table, movie_history + 1, axis=0).sum(axis=1)
    x = jnp.concatenate([tgt, hist], axis=1)
    x = jnp.maximum(x @ params["fc1_w"].T + params["fc1_b"], 0.0)
    x = jnp.maximum(x @ params["fc2_w"].T + params["fc2_b"], 0.0)
    return x @ params["fc3_w"].T + params["fc3_b"]


def init_params(key, n_movies, em_size=EM_SIZE):
    ks = jax.random.split(key, 7)

    def lin(kw, kb, fan_in, fan_out):
        bound = 1.0 / jnp.sqrt(jnp.float32(fan_in))
        w = jax.random.uniform(kw, (fan_out, fan_in), jnp.float32, -bound, bound)
        b = jax.random.uniform(kb, (fan_out,), jnp.float32, -bound, bound)
        return w, b

    table = jax.random.normal(ks[0], (n_movies + 1, em_size), jnp.float32)
    # torch forward does `self.table.weight.data[0, :] = 0` every call; the
    # table is never mutated here so a one-time fixup is equivalent.
    table = table.at[0, :].set(0.0)
    fc1_w, fc1_b = lin(ks[1], ks[2], 2 * em_size, 200)   # Linear(64, 200)
    fc2_w, fc2_b = lin(ks[3], ks[4], 200, 80)            # Linear(200, 80)
    fc3_w, fc3_b = lin(ks[5], ks[6], 80, 2)              # Linear(80, 2)
    return dict(table=table, fc1_w=fc1_w, fc1_b=fc1_b,
                fc2_w=fc2_w, fc2_b=fc2_b, fc3_w=fc3_w, fc3_b=fc3_b)


if __name__ == "__main__":
    key = jax.random.PRNGKey(0)
    n_movies, B, L = 50, 2, 8

    pkey, hkey, tkey = jax.random.split(key, 3)
    params = init_params(pkey, n_movies)

    movie_history = jax.random.randint(hkey, (B, L), 0, n_movies, dtype=jnp.int32)
    # pad the tail of each history with -1 (maps to the zeroed embedding row)
    movie_history = movie_history.at[:, L - 2:].set(-1)
    target_movie = jax.random.randint(tkey, (B,), 0, n_movies, dtype=jnp.int32)

    out = rec_model_forward(params, movie_history, target_movie)
    out = jax.block_until_ready(out)

    ref = rec_model_reference(params, movie_history, target_movie)
    assert out.shape == (B, 2)
    # bf16 compute inside the kernel vs f32 reference -> relaxed tolerance
    assert jnp.allclose(out, ref, atol=5e-2, rtol=5e-2)

    print("KERNEL_OK")
</pallas_src>

<mosaic_0001>
module attributes {stable_mosaic.version = 11 : i64} {
  func.func @rec_mlp_kernel(%arg0: i32, %arg1: memref<16x64xbf16, #tpu.memory_space<vmem>>, %arg2: memref<64x256xbf16, #tpu.memory_space<vmem>>, %arg3: memref<1x256xf32, #tpu.memory_space<vmem>>, %arg4: memref<256x128xbf16, #tpu.memory_space<vmem>>, %arg5: memref<1x128xf32, #tpu.memory_space<vmem>>, %arg6: memref<128x128xbf16, #tpu.memory_space<vmem>>, %arg7: memref<1x128xf32, #tpu.memory_space<vmem>>, %arg8: memref<16x2xf32, #tpu.memory_space<vmem>>) attributes {dimension_semantics = [#tpu.dimension_semantics<parallel>], iteration_bounds = array<i64: 1>, scalar_prefetch = 0 : i64, scratch_operands = 0 : i64, tpu.core_type = #tpu.core_type<tc>, window_params = [{transform_indices = @transform_0, window_bounds = array<i64: 16, 64>}, {pipeline_mode = #tpu.pipeline_mode<synchronous>, transform_indices = @transform_1, window_bounds = array<i64: 64, 256>}, {pipeline_mode = #tpu.pipeline_mode<synchronous>, transform_indices = @transform_2, window_bounds = array<i64: 1, 256>}, {pipeline_mode = #tpu.pipeline_mode<synchronous>, transform_indices = @transform_3, window_bounds = array<i64: 256, 128>}, {pipeline_mode = #tpu.pipeline_mode<synchronous>, transform_indices = @transform_4, window_bounds = array<i64: 1, 128>}, {pipeline_mode = #tpu.pipeline_mode<synchronous>, transform_indices = @transform_5, window_bounds = array<i64: 128, 128>}, {pipeline_mode = #tpu.pipeline_mode<synchronous>, transform_indices = @transform_6, window_bounds = array<i64: 1, 128>}, {transform_indices = @transform_7, window_bounds = array<i64: 16, 2>}]} {
    %c0 = arith.constant 0 : index
    %c0_0 = arith.constant 0 : index
    %0 = vector.load %arg1[%c0, %c0_0] : memref<16x64xbf16, #tpu.memory_space<vmem>>, vector<16x64xbf16>
    %c0_1 = arith.constant 0 : index
    %c0_2 = arith.constant 0 : index
    %1 = vector.load %arg2[%c0_1, %c0_2] : memref<64x256xbf16, #tpu.memory_space<vmem>>, vector<64x256xbf16>
    %cst = arith.constant dense<0.000000e+00> : vector<16x256xf32>
    %2 = tpu.matmul %0, %1, %cst {dimension_numbers = #tpu.dot_dimension_numbers<[1], [0], [0], [1], [0, 0, 1, 1], [], []>} : vector<16x64xbf16>, vector<64x256xbf16>, vector<16x256xf32> -> vector<16x256xf32>
    %c0_3 = arith.constant 0 : index
    %c0_4 = arith.constant 0 : index
    %3 = vector.load %arg3[%c0_3, %c0_4] : memref<1x256xf32, #tpu.memory_space<vmem>>, vector<1x256xf32>
    %4 = vector.broadcast %3 : vector<1x256xf32> to vector<16x256xf32>
    %5 = arith.addf %2, %4 : vector<16x256xf32>
    %cst_5 = arith.constant 0.000000e+00 : f32
    %6 = vector.broadcast %cst_5 : f32 to vector<16x256xf32>
    %7 = arith.maximumf %5, %6 : vector<16x256xf32>
    %8 = arith.truncf %7 : vector<16x256xf32> to vector<16x256xbf16>
    %c0_6 = arith.constant 0 : index
    %c0_7 = arith.constant 0 : index
    %9 = vector.load %arg4[%c0_6, %c0_7] : memref<256x128xbf16, #tpu.memory_space<vmem>>, vector<256x128xbf16>
    %cst_8 = arith.constant dense<0.000000e+00> : vector<16x128xf32>
    %10 = tpu.matmul %8, %9, %cst_8 {dimension_numbers = #tpu.dot_dimension_numbers<[1], [0], [0], [1], [0, 0, 1, 1], [], []>} : vector<16x256xbf16>, vector<256x128xbf16>, vector<16x128xf32> -> vector<16x128xf32>
    %c0_9 = arith.constant 0 : index
    %c0_10 = arith.constant 0 : index
    %11 = vector.load %arg5[%c0_9, %c0_10] : memref<1x128xf32, #tpu.memory_space<vmem>>, vector<1x128xf32>
    %12 = vector.broadcast %11 : vector<1x128xf32> to vector<16x128xf32>
    %13 = arith.addf %10, %12 : vector<16x128xf32>
    %cst_11 = arith.constant 0.000000e+00 : f32
    %14 = vector.broadcast %cst_11 : f32 to vector<16x128xf32>
    %15 = arith.maximumf %13, %14 : vector<16x128xf32>
    %16 = arith.truncf %15 : vector<16x128xf32> to vector<16x128xbf16>
    %c0_12 = arith.constant 0 : index
    %c0_13 = arith.constant 0 : index
    %17 = vector.load %arg6[%c0_12, %c0_13] : memref<128x128xbf16, #tpu.memory_space<vmem>>, vector<128x128xbf16>
    %cst_14 = arith.constant dense<0.000000e+00> : vector<16x128xf32>
    %18 = tpu.matmul %16, %17, %cst_14 {dimension_numbers = #tpu.dot_dimension_numbers<[1], [0], [0], [1], [0, 0, 1, 1], [], []>} : vector<16x128xbf16>, vector<128x128xbf16>, vector<16x128xf32> -> vector<16x128xf32>
    %c0_15 = arith.constant 0 : index
    %c0_16 = arith.constant 0 : index
    %19 = vector.load %arg7[%c0_15, %c0_16] : memref<1x128xf32, #tpu.memory_space<vmem>>, vector<1x128xf32>
    %20 = vector.broadcast %19 : vector<1x128xf32> to vector<16x128xf32>
    %21 = arith.addf %18, %20 : vector<16x128xf32>
    %22 = vector.extract_strided_slice %21 {offsets = [0, 0], sizes = [16, 2], strides = [1, 1]} : vector<16x128xf32> to vector<16x2xf32>
    %c0_17 = arith.constant 0 : index
    %c0_18 = arith.constant 0 : index
    %23 = vector.load %arg8[%c0_17, %c0_18] : memref<16x2xf32, #tpu.memory_space<vmem>>, vector<16x2xf32>
    tpu.vector_store %arg8[%c0_17, %c0_18], %22 {strides = array<i32>} : memref<16x2xf32, #tpu.memory_space<vmem>>, vector<16x2xf32>,
    return
  }
  func.func @transform_0(%arg0: i32) -> (i32, i32) {
    %c0_i32 = arith.constant 0 : i32
    %c0_i32_0 = arith.constant 0 : i32
    return %arg0, %c0_i32 : i32, i32
  }
  func.func @transform_1(%arg0: i32) -> (i32, i32) {
    %c0_i32 = arith.constant 0 : i32
    %c0_i32_0 = arith.constant 0 : i32
    %c0_i32_1 = arith.constant 0 : i32
    return %c0_i32, %c0_i32_0 : i32, i32
  }
  func.func @transform_2(%arg0: i32) -> (i32, i32) {
    %c0_i32 = arith.constant 0 : i32
    %c0_i32_0 = arith.constant 0 : i32
    %c0_i32_1 = arith.constant 0 : i32
    return %c0_i32, %c0_i32_0 : i32, i32
  }
  func.func @transform_3(%arg0: i32) -> (i32, i32) {
    %c0_i32 = arith.constant 0 : i32
    %c0_i32_0 = arith.constant 0 : i32
    %c0_i32_1 = arith.constant 0 : i32
    return %c0_i32, %c0_i32_0 : i32, i32
  }
  func.func @transform_4(%arg0: i32) -> (i32, i32) {
    %c0_i32 = arith.constant 0 : i32
    %c0_i32_0 = arith.constant 0 : i32
    %c0_i32_1 = arith.constant 0 : i32
    return %c0_i32, %c0_i32_0 : i32, i32
  }
  func.func @transform_5(%arg0: i32) -> (i32, i32) {
    %c0_i32 = arith.constant 0 : i32
    %c0_i32_0 = arith.constant 0 : i32
    %c0_i32_1 = arith.constant 0 : i32
    return %c0_i32, %c0_i32_0 : i32, i32
  }
  func.func @transform_6(%arg0: i32) -> (i32, i32) {
    %c0_i32 = arith.constant 0 : i32
    %c0_i32_0 = arith.constant 0 : i32
    %c0_i32_1 = arith.constant 0 : i32
    return %c0_i32, %c0_i32_0 : i32, i32
  }
  func.func @transform_7(%arg0: i32) -> (i32, i32) {
    %c0_i32 = arith.constant 0 : i32
    %c0_i32_0 = arith.constant 0 : i32
    return %arg0, %c0_i32 : i32, i32
  }
}

</mosaic_0001>

<llo_original>
// kernel: tpu_custom_call.1
$region0: #{tpu_custom_call.1}
  #allocation0 [shape = 'u32[]', space=smem, size = 0x4, offset = 0x4, fixed_abs, tag = 'smem constant byte address 0x4 - core index']
  #allocation1 [shape = 'u32[144,128]{1,0:T(1,128)}', space=vmem, size = 0x12000, scoped, tag = 'internal scratch']
  %s0 = inlined_call_operand.hbm [shape: bf16[16,64], index: 0, kind: input, shape index: {}]
  %s1 = inlined_call_operand.hbm [shape: bf16[64,256], index: 1, kind: input, shape index: {}]
  %s2 = inlined_call_operand.vmem [shape: f32[1,256], index: 2, kind: input, shape index: {}]
  %s3 = inlined_call_operand.hbm [shape: bf16[256,128], index: 3, kind: input, shape index: {}]
  %s4 = inlined_call_operand.vmem [shape: f32[1,128], index: 4, kind: input, shape index: {}]
  %s5 = inlined_call_operand.hbm [shape: bf16[128,128], index: 5, kind: input, shape index: {}]
  %s6 = inlined_call_operand.vmem [shape: f32[1,128], index: 6, kind: input, shape index: {}]
  %s7 = inlined_call_operand.vmem [shape: f32[16,2], index: 7, kind: output, shape index: {}]
  %s8 = sld [smem:[#allocation0]]
  $region54: #{tpu_custom_call.1} parent=0
    _
  %s10 = ssub.s32 1, %s8
  %s11 = scalar_select 0, %s10, %s8
  $region1: #{tpu_custom_call.1} parent=0
    #allocation2 [shape = 'u8[4096]{0}', space=vmem, size = 0x1000, scoped, tag = 'input window, operand 0, single buffered']
    #allocation3 [shape = 's32[1]{0}', space=sflag, size = 0x4, scoped, tag = 'scoped memory for tpu_custom_call.1']
    #allocation4 [shape = 'u8[32768]{0}', space=vmem, size = 0x8000, scoped, tag = 'input window, operand 1, single buffered']
    #allocation5 [shape = 's32[1]{0}', space=sflag, size = 0x4, scoped, tag = 'scoped memory for tpu_custom_call.1']
    #allocation6 [shape = 'u8[65536]{0}', space=vmem, size = 0x10000, scoped, tag = 'input window, operand 3, single buffered']
    #allocation7 [shape = 'u8[32768]{0}', space=vmem, size = 0x8000, scoped, tag = 'input window, operand 5, single buffered']
    #allocation8 [shape = 's32[1]{0}', space=sflag, size = 0x4, scoped, tag = 'scoped memory for tpu_custom_call.1']
    %12 = vsyncpa [#allocation3], 0
    %13 = vsyncpa [#allocation5], 0
    %14 = vsyncpa [#allocation8], 0
    // Predicated region
    $region2: #{tpu_custom_call.1} parent=1 // pred_check
      _
    $region3: #{tpu_custom_call.1} parent=1 // pred_check_branch
      %16 = sbr.rel (0) target = $region5
    $region4: #{tpu_custom_call.1} parent=1 // pred_region
      %s18 = ssub.s32 128, 128
      %19 = vsyncadd [#allocation3], %s18
      %s20 = sshll.u32 [#allocation2], 4
      %s21 = int_to_ptr.vmem [resolvable:$true] %s20
      %26 = dma.hbm_to_vmem [thread:$0]  %s0, 128, %s21, [#allocation3], 64, 64, 4
    $region5: #{tpu_custom_call.1} parent=1 // pred_fallthru
      _
    // Predicated region
    $region6: #{tpu_custom_call.1} parent=1 // pred_check
      _
    $region7: #{tpu_custom_call.1} parent=1 // pred_check_branch
      %28 = sbr.rel (0) target = $region9
    $region8: #{tpu_custom_call.1} parent=1 // pred_region
      %s30 = ssub.s32 1024, 1024
      %31 = vsyncadd [#allocation5], %s30
      %s32 = sshll.u32 [#allocation4], 4
      %s33 = int_to_ptr.vmem [resolvable:$true] %s32
      %38 = dma.hbm_to_vmem [thread:$0]  %s1, 1024, %s33, [#allocation5], 128, 128, 8
    $region9: #{tpu_custom_call.1} parent=1 // pred_fallthru
      _
    // Predicated region
    $region10: #{tpu_custom_call.1} parent=1 // pred_check
      _
    $region11: #{tpu_custom_call.1} parent=1 // pred_check_branch
      %40 = sbr.rel (0) target = $region13
    $region12: #{tpu_custom_call.1} parent=1 // pred_region
      _
    $region13: #{tpu_custom_call.1} parent=1 // pred_fallthru
      _
    // Predicated region
    $region14: #{tpu_custom_call.1} parent=1 // pred_check
      _
    $region15: #{tpu_custom_call.1} parent=1 // pred_check_branch
      %42 = sbr.rel (0) target = $region17
    $region16: #{tpu_custom_call.1} parent=1 // pred_region
      %s44 = ssub.s32 2048, 2048
      %45 = vsyncadd [#allocation5], %s44
      %s46 = sshll.u32 [#allocation6], 4
      %s47 = int_to_ptr.vmem [resolvable:$true] %s46
      %52 = dma.hbm_to_vmem [thread:$0]  %s3, 2048, %s47, [#allocation5], 64, 64, 4
    $region17: #{tpu_custom_call.1} parent=1 // pred_fallthru
      _
    // Predicated region
    $region18: #{tpu_custom_call.1} parent=1 // pred_check
      _
    $region19: #{tpu_custom_call.1} parent=1 // pred_check_branch
      %54 = sbr.rel (0) target = $region21
    $region20: #{tpu_custom_call.1} parent=1 // pred_region
      _
    $region21: #{tpu_custom_call.1} parent=1 // pred_fallthru
      _
    // Predicated region
    $region22: #{tpu_custom_call.1} parent=1 // pred_check
      _
    $region23: #{tpu_custom_call.1} parent=1 // pred_check_branch
      %56 = sbr.rel (0) target = $region25
    $region24: #{tpu_custom_call.1} parent=1 // pred_region
      %s58 = ssub.s32 1024, 1024
      %59 = vsyncadd [#allocation8], %s58
      %s60 = sshll.u32 [#allocation7], 4
      %s61 = int_to_ptr.vmem [resolvable:$true] %s60
      %66 = dma.hbm_to_vmem [thread:$0]  %s5, 1024, %s61, [#allocation8], 64, 64, 4
    $region25: #{tpu_custom_call.1} parent=1 // pred_fallthru
      _
    // Predicated region
    $region26: #{tpu_custom_call.1} parent=1 // pred_check
      _
    $region27: #{tpu_custom_call.1} parent=1 // pred_check_branch
      %68 = sbr.rel (0) target = $region29
    $region28: #{tpu_custom_call.1} parent=1 // pred_region
      _
    $region29: #{tpu_custom_call.1} parent=1 // pred_fallthru
      _
    // Predicated region
    $region30: #{tpu_custom_call.1} parent=1 // pred_check
      _
    $region31: #{tpu_custom_call.1} parent=1 // pred_check_branch
      %70 = sbr.rel (0) target = $region33
    $region32: #{tpu_custom_call.1} parent=1 // pred_region
      %71 = dma.done [#allocation3], 128
    $region33: #{tpu_custom_call.1} parent=1 // pred_fallthru
      _
    // Predicated region
    $region34: #{tpu_custom_call.1} parent=1 // pred_check
      _
    $region35: #{tpu_custom_call.1} parent=1 // pred_check_branch
      %73 = sbr.rel (0) target = $region37
    $region36: #{tpu_custom_call.1} parent=1 // pred_region
      %74 = dma.done [#allocation5], 1024
    $region37: #{tpu_custom_call.1} parent=1 // pred_fallthru
      _
    // Predicated region
    $region38: #{tpu_custom_call.1} parent=1 // pred_check
      _
    $region39: #{tpu_custom_call.1} parent=1 // pred_check_branch
      %76 = sbr.rel (0) target = $region41
    $region40: #{tpu_custom_call.1} parent=1 // pred_region
      %77 = dma.done [#allocation5], 2048
    $region41: #{tpu_custom_call.1} parent=1 // pred_fallthru
      _
    // Predicated region
    $region42: #{tpu_custom_call.1} parent=1 // pred_check
      _
    $region43: #{tpu_custom_call.1} parent=1 // pred_check_branch
      %79 = sbr.rel (0) target = $region45
    $region44: #{tpu_custom_call.1} parent=1 // pred_region
      %80 = dma.done [#allocation8], 1024
    $region45: #{tpu_custom_call.1} parent=1 // pred_fallthru
      _
    %v82 = vld [vmem:[#allocation2] sm:$0xf]
    %v83 = vld [vmem:[#allocation2 + $0x4] sm:$0xf]
    %v84 = vld [vmem:[#allocation4] sm:$0xff]
    %v85 = vld [vmem:[#allocation4 + $0x8] sm:$0xff]
    %v86 = vld [vmem:[#allocation4 + $0x10] sm:$0xff]
    %v87 = vld [vmem:[#allocation4 + $0x18] sm:$0xff]
    %v88 = vld [vmem:[#allocation4 + $0x20] sm:$0xff]
    %v89 = vld [vmem:[#allocation4 + $0x28] sm:$0xff]
    %v90 = vld [vmem:[#allocation4 + $0x30] sm:$0xff]
    %v91 = vld [vmem:[#allocation4 + $0x38] sm:$0xff]
    %v92 = vld [vmem:[%s2] sm:$0x3]
    %v94 = vlaneseq
    %v95 = vshrl.u32 %v94, 7
    %v96 = vsub.s32 0, %v95
    %v97 = vrot.slane %v92, %v96
    %v98 = vlaneseq
    %v99 = vshrl.u32 %v98, 7
    %v100 = vsub.s32 1, %v99
    %v101 = vrot.slane %v92, %v100
    %v106 = vunpack.c.l.b16 %v82
    %v107 = vunpack.c.l.b16 %v83
    %v108 = vpack.c.b16 %v107, %v106
    %v117 = vunpack.c.l.b16 %v84
    %v118 = vunpack.c.h.b16 %v84
    %v119 = vunpack.c.l.b16 %v85
    %v120 = vunpack.c.h.b16 %v85
    %v121 = vunpack.c.l.b16 %v86
    %v122 = vunpack.c.h.b16 %v86
    %v123 = vunpack.c.l.b16 %v87
    %v124 = vunpack.c.h.b16 %v87
    %v125 = vunpack.c.l.b16 %v88
    %v126 = vunpack.c.h.b16 %v88
    %v127 = vunpack.c.l.b16 %v89
    %v128 = vunpack.c.h.b16 %v89
    %v129 = vunpack.c.l.b16 %v90
    %v130 = vunpack.c.h.b16 %v90
    %v131 = vunpack.c.l.b16 %v91
    %v132 = vunpack.c.h.b16 %v91
    %v133 = vpack.c.b16 %v119, %v117
    %v134 = vpack.c.b16 %v120, %v118
    %v135 = vpack.c.b16 %v123, %v121
    %v136 = vpack.c.b16 %v124, %v122
    %v137 = vpack.c.b16 %v127, %v125
    %v138 = vpack.c.b16 %v128, %v126
    %v139 = vpack.c.b16 %v131, %v129
    %v140 = vpack.c.b16 %v132, %v130
    %vm149 = vcmask 523264
    %v151 = vsel %vm149, %v108, 0
    %153 = vmatprep.subr.bf16.mxu0 0
    %154 = vmatpush1.bf16.msra.mxu0 0
    %155 = vmatprep.subr.bf16.mxu0 0
    %156 = vmatpush1.bf16.msra.mxu0 0
    %157 = vmatprep.subr.bf16.mxu0 0
    %158 = vmatpush1.bf16.msra.mxu0 0
    %159 = vmatprep.subr.bf16.mxu0 0
    %160 = vmatpush1.bf16.msra.mxu0 0
    %161 = vmatprep.subr.bf16.mxu0 %v140
    %162 = vmatpush1.bf16.msra.mxu0 %v139
    %163 = vmatprep.subr.bf16.mxu0 %v138
    %164 = vmatpush1.bf16.msra.mxu0 %v137
    %165 = vmatprep.subr.bf16.mxu0 %v136
    %166 = vmatpush1.bf16.msra.mxu0 %v135
    %167 = vmatprep.subr.bf16.mxu0 %v134
    %168 = vmatpush1.bf16.msra.mxu0 %v133
    %169 = vmatprep.subr.bf16.mxu0 0
    %170 = vmatpush2.bf16.msra.mxu0 0
    %171 = vmatprep.subr.bf16.mxu0 0
    %172 = vmatpush2.bf16.msra.mxu0 0
    %173 = vmatprep.subr.bf16.mxu0 0
    %174 = vmatpush2.bf16.msra.mxu0 0
    %175 = vmatprep.subr.bf16.mxu0 0
    %176 = vmatpush2.bf16.msra.mxu0 0
    %177 = vmatprep.subr.bf16.mxu0 0
    %178 = vmatpush2.bf16.msra.mxu0 0
    %179 = vmatprep.subr.bf16.mxu0 0
    %180 = vmatpush2.bf16.msra.mxu0 0
    %181 = vmatprep.subr.bf16.mxu0 0
    %182 = vmatpush2.bf16.msra.mxu0 0
    %183 = vmatprep.subr.bf16.mxu0 0
    %184 = vmatpush2.bf16.msra.mxu0 0
    %185 = vmatprep.mubr.bf16.mxu0 0
    %186 = vmatmul.mubr.bf16.gmra.mxu0 %v151
    %v187 = vpop.f32.mrf.mxu0
    %v188 = vadd.f32 %v97, %v187
    %v189 = vpop.f32.mrf.mxu0
    %v190 = vadd.f32 %v101, %v189
    %v191 = vpop.f32.mrf.mxu0
    %v192 = vadd.f32 %v97, %v191
    %v193 = vpop.f32.mrf.mxu0
    %v194 = vadd.f32 %v101, %v193
    %195 = vdwg.mxu0
    %v196 = vmax.f32 %v188, 0.0
    %v197 = vmax.f32 %v190, 0.0
    %v198 = vmax.f32 %v192, 0.0
    %v199 = vmax.f32 %v194, 0.0
    %v200 = vpack.c.bf16 %v198, %v196
    %v201 = vpack.c.bf16 %v199, %v197
    %v202 = vld [vmem:[#allocation6] sm:$0xf]
    %v203 = vld [vmem:[#allocation6 + $0x4] sm:$0xf]
    %v204 = vld [vmem:[#allocation6 + $0x8] sm:$0xf]
    %v205 = vld [vmem:[#allocation6 + $0xc] sm:$0xf]
    %v206 = vld [vmem:[#allocation6 + $0x10] sm:$0xf]
    %v207 = vld [vmem:[#allocation6 + $0x14] sm:$0xf]
    %v208 = vld [vmem:[#allocation6 + $0x18] sm:$0xf]
    %v209 = vld [vmem:[#allocation6 + $0x1c] sm:$0xf]
    %v210 = vld [vmem:[#allocation6 + $0x20] sm:$0xf]
    %v211 = vld [vmem:[#allocation6 + $0x24] sm:$0xf]
    %v212 = vld [vmem:[#allocation6 + $0x28] sm:$0xf]
    %v213 = vld [vmem:[#allocation6 + $0x2c] sm:$0xf]
    %v214 = vld [vmem:[#allocation6 + $0x30] sm:$0xf]
    %v215 = vld [vmem:[#allocation6 + $0x34] sm:$0xf]
    %v216 = vld [vmem:[#allocation6 + $0x38] sm:$0xf]
    %v217 = vld [vmem:[#allocation6 + $0x3c] sm:$0xf]
    %v218 = vld [vmem:[#allocation6 + $0x40] sm:$0xf]
    %v219 = vld [vmem:[#allocation6 + $0x44] sm:$0xf]
    %v220 = vld [vmem:[#allocation6 + $0x48] sm:$0xf]
    %v221 = vld [vmem:[#allocation6 + $0x4c] sm:$0xf]
    %v222 = vld [vmem:[#allocation6 + $0x50] sm:$0xf]
    %v223 = vld [vmem:[#allocation6 + $0x54] sm:$0xf]
    %v224 = vld [vmem:[#allocation6 + $0x58] sm:$0xf]
    %v225 = vld [vmem:[#allocation6 + $0x5c] sm:$0xf]
    %v226 = vld [vmem:[#allocation6 + $0x60] sm:$0xf]
    %v227 = vld [vmem:[#allocation6 + $0x64] sm:$0xf]
    %v228 = vld [vmem:[#allocation6 + $0x68] sm:$0xf]
    %v229 = vld [vmem:[#allocation6 + $0x6c] sm:$0xf]
    %v230 = vld [vmem:[#allocation6 + $0x70] sm:$0xf]
    %v231 = vld [vmem:[#allocation6 + $0x74] sm:$0xf]
    %v232 = vld [vmem:[#allocation6 + $0x78] sm:$0xf]
    %v233 = vld [vmem:[#allocation6 + $0x7c] sm:$0xf]
    %v234 = vld [vmem:[%s4] sm:$0x1]
    %v236 = vlaneseq
    %v237 = vshrl.u32 %v236, 7
    %v238 = vsub.s32 0, %v237
    %v239 = vrot.slane %v234, %v238
    %v273 = vunpack.c.l.b16 %v202
    %v274 = vunpack.c.l.b16 %v203
    %v275 = vunpack.c.l.b16 %v204
    %v276 = vunpack.c.l.b16 %v205
    %v277 = vunpack.c.l.b16 %v206
    %v278 = vunpack.c.l.b16 %v207
    %v279 = vunpack.c.l.b16 %v208
    %v280 = vunpack.c.l.b16 %v209
    %v281 = vunpack.c.l.b16 %v210
    %v282 = vunpack.c.l.b16 %v211
    %v283 = vunpack.c.l.b16 %v212
    %v284 = vunpack.c.l.b16 %v213
    %v285 = vunpack.c.l.b16 %v214
    %v286 = vunpack.c.l.b16 %v215
    %v287 = vunpack.c.l.b16 %v216
    %v288 = vunpack.c.l.b16 %v217
    %v289 = vunpack.c.l.b16 %v218
    %v290 = vunpack.c.l.b16 %v219
    %v291 = vunpack.c.l.b16 %v220
    %v292 = vunpack.c.l.b16 %v221
    %v293 = vunpack.c.l.b16 %v222
    %v294 = vunpack.c.l.b16 %v223
    %v295 = vunpack.c.l.b16 %v224
    %v296 = vunpack.c.l.b16 %v225
    %v297 = vunpack.c.l.b16 %v226
    %v298 = vunpack.c.l.b16 %v227
    %v299 = vunpack.c.l.b16 %v228
    %v300 = vunpack.c.l.b16 %v229
    %v301 = vunpack.c.l.b16 %v230
    %v302 = vunpack.c.l.b16 %v231
    %v303 = vunpack.c.l.b16 %v232
    %v304 = vunpack.c.l.b16 %v233
    %v305 = vpack.c.b16 %v274, %v273
    %v306 = vpack.c.b16 %v276, %v275
    %v307 = vpack.c.b16 %v278, %v277
    %v308 = vpack.c.b16 %v280, %v279
    %v309 = vpack.c.b16 %v282, %v281
    %v310 = vpack.c.b16 %v284, %v283
    %v311 = vpack.c.b16 %v286, %v285
    %v312 = vpack.c.b16 %v288, %v287
    %v313 = vpack.c.b16 %v290, %v289
    %v314 = vpack.c.b16 %v292, %v291
    %v315 = vpack.c.b16 %v294, %v293
    %v316 = vpack.c.b16 %v296, %v295
    %v317 = vpack.c.b16 %v298, %v297
    %v318 = vpack.c.b16 %v300, %v299
    %v319 = vpack.c.b16 %v302, %v301
    %v320 = vpack.c.b16 %v304, %v303
    %337 = vmatprep.subr.bf16.mxu0 0
    %338 = vmatpush1.bf16.msra.mxu0 %v312
    %339 = vmatprep.subr.bf16.mxu0 0
    %340 = vmatpush1.bf16.msra.mxu0 %v311
    %341 = vmatprep.subr.bf16.mxu0 0
    %342 = vmatpush1.bf16.msra.mxu0 %v310
    %343 = vmatprep.subr.bf16.mxu0 0
    %344 = vmatpush1.bf16.msra.mxu0 %v309
    %345 = vmatprep.subr.bf16.mxu0 0
    %346 = vmatpush1.bf16.msra.mxu0 %v308
    %347 = vmatprep.subr.bf16.mxu0 0
    %348 = vmatpush1.bf16.msra.mxu0 %v307
    %349 = vmatprep.subr.bf16.mxu0 0
    %350 = vmatpush1.bf16.msra.mxu0 %v306
    %351 = vmatprep.subr.bf16.mxu0 0
    %352 = vmatpush1.bf16.msra.mxu0 %v305
    %353 = vmatprep.subr.bf16.mxu0 0
    %354 = vmatpush2.bf16.msra.mxu0 %v320
    %355 = vmatprep.subr.bf16.mxu0 0
    %356 = vmatpush2.bf16.msra.mxu0 %v319
    %357 = vmatprep.subr.bf16.mxu0 0
    %358 = vmatpush2.bf16.msra.mxu0 %v318
    %359 = vmatprep.subr.bf16.mxu0 0
    %360 = vmatpush2.bf16.msra.mxu0 %v317
    %361 = vmatprep.subr.bf16.mxu0 0
    %362 = vmatpush2.bf16.msra.mxu0 %v316
    %363 = vmatprep.subr.bf16.mxu0 0
    %364 = vmatpush2.bf16.msra.mxu0 %v315
    %365 = vmatprep.subr.bf16.mxu0 0
    %366 = vmatpush2.bf16.msra.mxu0 %v314
    %367 = vmatprep.subr.bf16.mxu0 0
    %368 = vmatpush2.bf16.msra.mxu0 %v313
    %369 = vmatprep.mubr.bf16.mxu0 %v201
    %370 = vmatmul.mubr.bf16.gmra.mxu0 %v200
    %v371 = vpop.f32.mrf.mxu0
    %v372 = vadd.f32 %v239, %v371
    %v373 = vpop.f32.mrf.mxu0
    %v374 = vpop.f32.mrf.mxu0
    %v375 = vadd.f32 %v239, %v374
    %v376 = vpop.f32.mrf.mxu0
    %377 = vdwg.mxu0
    %v378 = vmax.f32 %v372, 0.0
    %v379 = vmax.f32 %v375, 0.0
    %v380 = vpack.c.bf16 %v379, %v378
    %v381 = vld [vmem:[#allocation7] sm:$0xf]
    %v382 = vld [vmem:[#allocation7 + $0x4] sm:$0xf]
    %v383 = vld [vmem:[#allocation7 + $0x8] sm:$0xf]
    %v384 = vld [vmem:[#allocation7 + $0xc] sm:$0xf]
    %v385 = vld [vmem:[#allocation7 + $0x10] sm:$0xf]
    %v386 = vld [vmem:[#allocation7 + $0x14] sm:$0xf]
    %v387 = vld [vmem:[#allocation7 + $0x18] sm:$0xf]
    %v388 = vld [vmem:[#allocation7 + $0x1c] sm:$0xf]
    %v389 = vld [vmem:[#allocation7 + $0x20] sm:$0xf]
    %v390 = vld [vmem:[#allocation7 + $0x24] sm:$0xf]
    %v391 = vld [vmem:[#allocation7 + $0x28] sm:$0xf]
    %v392 = vld [vmem:[#allocation7 + $0x2c] sm:$0xf]
    %v393 = vld [vmem:[#allocation7 + $0x30] sm:$0xf]
    %v394 = vld [vmem:[#allocation7 + $0x34] sm:$0xf]
    %v395 = vld [vmem:[#allocation7 + $0x38] sm:$0xf]
    %v396 = vld [vmem:[#allocation7 + $0x3c] sm:$0xf]
    %v397 = vld [vmem:[%s6] sm:$0x1]
    %v399 = vlaneseq
    %v400 = vshrl.u32 %v399, 7
    %v401 = vsub.s32 0, %v400
    %v402 = vrot.slane %v397, %v401
    %v420 = vunpack.c.l.b16 %v381
    %v421 = vunpack.c.l.b16 %v382
    %v422 = vunpack.c.l.b16 %v383
    %v423 = vunpack.c.l.b16 %v384
    %v424 = vunpack.c.l.b16 %v385
    %v425 = vunpack.c.l.b16 %v386
    %v426 = vunpack.c.l.b16 %v387
    %v427 = vunpack.c.l.b16 %v388
    %v428 = vunpack.c.l.b16 %v389
    %v429 = vunpack.c.l.b16 %v390
    %v430 = vunpack.c.l.b16 %v391
    %v431 = vunpack.c.l.b16 %v392
    %v432 = vunpack.c.l.b16 %v393
    %v433 = vunpack.c.l.b16 %v394
    %v434 = vunpack.c.l.b16 %v395
    %v435 = vunpack.c.l.b16 %v396
    %v436 = vpack.c.b16 %v421, %v420
    %v437 = vpack.c.b16 %v423, %v422
    %v438 = vpack.c.b16 %v425, %v424
    %v439 = vpack.c.b16 %v427, %v426
    %v440 = vpack.c.b16 %v429, %v428
    %v441 = vpack.c.b16 %v431, %v430
    %v442 = vpack.c.b16 %v433, %v432
    %v443 = vpack.c.b16 %v435, %v434
    %452 = vmatprep.subr.bf16.mxu0 0
    %453 = vmatpush1.bf16.msra.mxu0 %v443
    %454 = vmatprep.subr.bf16.mxu0 0
    %455 = vmatpush1.bf16.msra.mxu0 %v442
    %456 = vmatprep.subr.bf16.mxu0 0
    %457 = vmatpush1.bf16.msra.mxu0 %v441
    %458 = vmatprep.subr.bf16.mxu0 0
    %459 = vmatpush1.bf16.msra.mxu0 %v440
    %460 = vmatprep.subr.bf16.mxu0 0
    %461 = vmatpush1.bf16.msra.mxu0 %v439
    %462 = vmatprep.subr.bf16.mxu0 0
    %463 = vmatpush1.bf16.msra.mxu0 %v438
    %464 = vmatprep.subr.bf16.mxu0 0
    %465 = vmatpush1.bf16.msra.mxu0 %v437
    %466 = vmatprep.subr.bf16.mxu0 0
    %467 = vmatpush1.bf16.msra.mxu0 %v436
    %468 = vmatprep.subr.bf16.mxu0 0
    %469 = vmatpush2.bf16.msra.mxu0 0
    %470 = vmatprep.subr.bf16.mxu0 0
    %471 = vmatpush2.bf16.msra.mxu0 0
    %472 = vmatprep.subr.bf16.mxu0 0
    %473 = vmatpush2.bf16.msra.mxu0 0
    %474 = vmatprep.subr.bf16.mxu0 0
    %475 = vmatpush2.bf16.msra.mxu0 0
    %476 = vmatprep.subr.bf16.mxu0 0
    %477 = vmatpush2.bf16.msra.mxu0 0
    %478 = vmatprep.subr.bf16.mxu0 0
    %479 = vmatpush2.bf16.msra.mxu0 0
    %480 = vmatprep.subr.bf16.mxu0 0
    %481 = vmatpush2.bf16.msra.mxu0 0
    %482 = vmatprep.subr.bf16.mxu0 0
    %483 = vmatpush2.bf16.msra.mxu0 0
    %484 = vmatprep.mubr.bf16.mxu0 0
    %485 = vmatmul.mubr.bf16.gmra.mxu0 %v380
    %v486 = vpop.f32.mrf.mxu0
    %v487 = vadd.f32 %v402, %v486
    %v488 = vpop.f32.mrf.mxu0
    %v489 = vpop.f32.mrf.mxu0
    %v490 = vadd.f32 %v402, %v489
    %v491 = vpop.f32.mrf.mxu0
    %492 = vdwg.mxu0
    %vm493 = vcmask 15360
    %494 = vst.msk [vmem:[%s7] sm:$0xff] %vm493, %v487
    %495 = vst.msk [vmem:[%s7 + $0x8] sm:$0xff] %vm493, %v490
    // Predicated region
    $region46: #{tpu_custom_call.1} parent=1 // pred_check
      _
    $region47: #{tpu_custom_call.1} parent=1 // pred_check_branch
      %497 = sbr.rel (0) target = $region49
    $region48: #{tpu_custom_call.1} parent=1 // pred_region
      _
    $region49: #{tpu_custom_call.1} parent=1 // pred_fallthru
      _
    // Predicated region
    $region50: #{tpu_custom_call.1} parent=1 // pred_check
      _
    $region51: #{tpu_custom_call.1} parent=1 // pred_check_branch
      %499 = sbr.rel (0) target = $region53
    $region52: #{tpu_custom_call.1} parent=1 // pred_region
      _
    $region53: #{tpu_custom_call.1} parent=1 // pred_fallthru
      _
    %500 = vsyncpa [#allocation3], 1
    %501 = vsyncpa [#allocation5], 1
    %502 = vsyncpa [#allocation8], 1

</llo_original>
